<compile_context>
chip_gen: v5e
topology: v5e:2x2
jax: 0.10.0
libtpu: 0.0.40
codegen_flags: <defaults>
</compile_context>

<pallas_src>
import functools

import jax
import jax.numpy as jnp
from jax import lax
from jax.experimental import pallas as pl
from jax.experimental.pallas import tpu as pltpu

EPS = 1e-5
LANES = 128
MAX_ROW_TILE = 4096           # f32 input block = 2 MiB at 4096 rows
_TARGET_STEP_BYTES = 4 << 20  # ~4 MiB of fresh input (both operands) per step


def _default_num_cores() -> int:
    """2 only on parts whose TensorCores are fed by one grid 'parallel' axis."""
    try:
        kind = jax.devices()[0].device_kind.lower()
    except Exception:
        return 1
    # v7x: 2 TensorCores per chip; v4/v5p megacore also shards a 'parallel'
    # grid axis across its 2 cores.  v5e / v6e are single-TensorCore devices.
    if any(tag in kind for tag in ("7x", "v7", "v4", "v5p")):
        return 2
    return 1


def _pick_row_tile(rows: int, itemsize_sum: int, max_row_tile: int) -> int:
    if rows <= max_row_tile:
        return rows  # single full-array block (always tiling-legal)
    rt = _TARGET_STEP_BYTES // (LANES * itemsize_sum)
    rt = min(int(rt), int(max_row_tile))
    rt -= rt % 32    # multiple of 32 keeps f32/bf16/int8 sublane tiling legal
    return max(rt, 32)


def _dice_partial_kernel(o_ref, t_ref, isum_ref, usum_ref, iacc, uacc, *,
                         row_tile, rows, steps_per_core, total_steps,
                         needs_mask):
    c = pl.program_id(0)
    s = pl.program_id(1)

    @pl.when(s == 0)
    def _():
        iacc[...] = jnp.zeros_like(iacc)
        uacc[...] = jnp.zeros_like(uacc)

    o = o_ref[...].astype(jnp.float32)
    t = t_ref[...].astype(jnp.float32)

    def accumulate(ov, tv):
        iacc[...] += ov * tv        # per-lane partial of sum(o * t)
        uacc[...] += ov + tv        # per-lane partial of sum(o) + sum(t)

    if needs_mask:  # static Python bool; only emitted if a partial step exists
        # True (un-clamped) global step; the input index_map clamps the DMA,
        # so out-of-range steps re-read the last block and must add zero.
        g = c * steps_per_core + s

        @pl.when(g < total_steps - 1)       # steady state: bare 4-op path
        def _():
            accumulate(o, t)

        @pl.when(g >= total_steps - 1)      # the single partial/clamped step
        def _():
            row_ids = lax.broadcasted_iota(jnp.int32, (row_tile, LANES), 0)
            valid = (g * row_tile + row_ids) < rows
            accumulate(jnp.where(valid, o, 0.0), jnp.where(valid, t, 0.0))
    else:
        accumulate(o, t)

    # Once per core: sublane-reduce the resident accumulators and emit only a
    # tiny (1, 1, 128) partial per accumulator.
    @pl.when(s == steps_per_core - 1)
    def _():
        isum_ref[...] = jnp.sum(iacc[...], axis=0, keepdims=True)[None]
        usum_ref[...] = jnp.sum(uacc[...], axis=0, keepdims=True)[None]


def _dice_partial_sums(o2, t2, max_row_tile, ncores):
    """Returns (sum(o*t), sum(o)+sum(t)) over a lane-dense (rows, 128) slab."""
    rows = o2.shape[0]
    itemsize_sum = o2.dtype.itemsize + t2.dtype.itemsize
    row_tile = _pick_row_tile(rows, itemsize_sum, max_row_tile)
    total_steps = pl.cdiv(rows, row_tile)

    nc = _default_num_cores() if ncores is None else int(ncores)
    nc = max(1, min(nc, 2))
    if total_steps < nc:
        nc = 1
    steps_per_core = pl.cdiv(total_steps, nc)
    needs_mask = (steps_per_core * nc * row_tile) != rows

    def in_map(c, s):
        # Clamp the DMA block index; partial/out-of-range steps are masked
        # inside the kernel so re-reading the last block contributes nothing.
        return (jnp.minimum(c * steps_per_core + s, total_steps - 1), 0)

    def out_map(c, s):
        return (c, 0, 0)

    kernel = functools.partial(
        _dice_partial_kernel,
        row_tile=row_tile, rows=rows, steps_per_core=steps_per_core,
        total_steps=total_steps, needs_mask=needs_mask)

    # Explicit VMEM budget: double-buffered inputs + 2 f32 scratch accumulators
    # + tiny outputs + headroom.  Stays well under v5e/v6e/v7x scoped limits.
    in_block_bytes = row_tile * LANES * itemsize_sum
    scratch_bytes = 2 * row_tile * LANES * 4
    out_bytes = 2 * 2 * LANES * 4
    vmem_limit = int(2 * in_block_bytes + scratch_bytes + 4 * out_bytes
                     + (8 << 20))

    isum, usum = pl.pallas_call(
        kernel,
        out_shape=(
            jax.ShapeDtypeStruct((nc, 1, LANES), jnp.float32),
            jax.ShapeDtypeStruct((nc, 1, LANES), jnp.float32),
        ),
        grid_spec=pltpu.PrefetchScalarGridSpec(
            num_scalar_prefetch=0,
            grid=(nc, steps_per_core),
            in_specs=[
                pl.BlockSpec((row_tile, LANES), in_map),
                pl.BlockSpec((row_tile, LANES), in_map),
            ],
            out_specs=(
                pl.BlockSpec((1, 1, LANES), out_map),
                pl.BlockSpec((1, 1, LANES), out_map),
            ),
            scratch_shapes=[
                pltpu.VMEM((row_tile, LANES), jnp.float32),
                pltpu.VMEM((row_tile, LANES), jnp.float32),
            ],
        ),
        compiler_params=pltpu.CompilerParams(
            dimension_semantics=("parallel", "arbitrary"),
            vmem_limit_bytes=vmem_limit,
        ),
        cost_estimate=pl.CostEstimate(
            flops=4 * rows * LANES, transcendentals=0,
            bytes_accessed=rows * LANES * itemsize_sum + 2 * nc * LANES * 4),
    )(o2, t2)

    # Tiny final reduction (a few KiB at most) in plain JAX.
    return jnp.sum(isum), jnp.sum(usum)


def dice_loss(outputs: jax.Array, targets: jax.Array, *,
              max_row_tile: int = MAX_ROW_TILE, ncores=None) -> jax.Array:
    """Soft dice loss with per_image=False (matches DiceLoss.forward)."""
    o_flat = outputs.reshape(-1)
    t_flat = targets.reshape(-1)
    # Masks: 1 byte/elem into the kernel instead of a 4-byte f32 HBM copy.
    if o_flat.dtype == jnp.bool_:
        o_flat = o_flat.astype(jnp.int8)
    if t_flat.dtype == jnp.bool_:
        t_flat = t_flat.astype(jnp.int8)

    n = o_flat.shape[0]
    if n == 0:
        # PyTorch: 1 - (0 + eps) / (0 + 0 + eps) == 0.
        return jnp.float32(0.0)

    rows = n // LANES
    rem = n - rows * LANES

    tail_inter = jnp.float32(0.0)
    tail_sums = jnp.float32(0.0)
    if rem:
        # <128-element tail handled with a tiny JAX sum (no padded HBM copy).
        o_tail = o_flat[rows * LANES:].astype(jnp.float32)
        t_tail = t_flat[rows * LANES:].astype(jnp.float32)
        tail_inter = jnp.sum(o_tail * t_tail)
        tail_sums = jnp.sum(o_tail) + jnp.sum(t_tail)

    if rows == 0:
        inter = tail_inter
        sums = tail_sums
    else:
        if rem:
            o_flat = o_flat[:rows * LANES]
            t_flat = t_flat[:rows * LANES]
        o2 = o_flat.reshape(rows, LANES)
        t2 = t_flat.reshape(rows, LANES)
        k_inter, k_sums = _dice_partial_sums(o2, t2, max_row_tile, ncores)
        inter = k_inter + tail_inter
        sums = k_sums + tail_sums

    union = sums + jnp.float32(EPS)
    return jnp.float32(1.0) - (jnp.float32(2.0) * inter + jnp.float32(EPS)) / union


def _dice_loss_ref(outputs, targets):
    o = outputs.reshape(1, -1).astype(jnp.float32)
    t = targets.reshape(1, -1).astype(jnp.float32)
    inter = jnp.sum(o * t, axis=1)
    union = jnp.sum(o, axis=1) + jnp.sum(t, axis=1) + EPS
    return jnp.mean(1.0 - (2.0 * inter + EPS) / union)


if __name__ == "__main__":
    key = jax.random.PRNGKey(0)
    k1, k2, k3, k4, k5, k6 = jax.random.split(key, 6)

    # 1) Small NCHW case with a boolean mask target (int8 kernel input path,
    #    single full-array block, rows = 4096/128 = 32).
    x = jax.nn.sigmoid(jax.random.normal(k1, (2, 4, 16, 32), dtype=jnp.float32))
    y = jax.random.uniform(k2, (2, 4, 16, 32)) > 0.5
    loss = jax.block_until_ready(dice_loss(x, y))
    ref = jax.block_until_ready(_dice_loss_ref(x, y))
    assert jnp.allclose(loss, ref, atol=1e-5, rtol=1e-4), (loss, ref)

    # 2) Multi-step grid + forced 2-core split + clamped/masked tail step
    #    (rows = 1088, row_tile = 256 -> 5 real steps, 6 padded).
    x2 = jax.nn.sigmoid(jax.random.normal(k3, (2, 4, 136, 128), dtype=jnp.float32))
    y2 = (jax.random.uniform(k4, (2, 4, 136, 128)) > 0.5).astype(jnp.float32)
    loss2 = jax.block_until_ready(dice_loss(x2, y2, max_row_tile=256, ncores=2))
    ref2 = jax.block_until_ready(_dice_loss_ref(x2, y2))
    assert jnp.allclose(loss2, ref2, atol=1e-5, rtol=1e-4), (loss2, ref2)

    # 3) Flattened size not a multiple of 128 (n = 1155): lane-aligned prefix
    #    through the kernel + tiny wrapper tail sum, no jnp.pad copy.
    x3 = jax.nn.sigmoid(jax.random.normal(k5, (3, 5, 7, 11), dtype=jnp.float32))
    y3 = (jax.random.uniform(k6, (3, 5, 7, 11)) > 0.5).astype(jnp.float32)
    loss3 = jax.block_until_ready(dice_loss(x3, y3))
    ref3 = jax.block_until_ready(_dice_loss_ref(x3, y3))
    assert jnp.allclose(loss3, ref3, atol=1e-5, rtol=1e-4), (loss3, ref3)

    # 4) Tiny input (n < 128): pure-wrapper path (no kernel launch).
    x4 = x3[:1, :1, :5, :9]
    y4 = y3[:1, :1, :5, :9]
    loss4 = jax.block_until_ready(dice_loss(x4, y4))
    ref4 = jax.block_until_ready(_dice_loss_ref(x4, y4))
    assert jnp.allclose(loss4, ref4, atol=1e-5, rtol=1e-4), (loss4, ref4)

    print("KERNEL_OK")
</pallas_src>

<mosaic_0001>
module attributes {stable_mosaic.version = 11 : i64} {
  func.func @_dice_partial_kernel(%arg0: i32, %arg1: i32, %arg2: memref<32x128xf32, #tpu.memory_space<vmem>>, %arg3: memref<32x128xi8, #tpu.memory_space<vmem>>, %arg4: memref<1x1x128xf32, #tpu.memory_space<vmem>>, %arg5: memref<1x1x128xf32, #tpu.memory_space<vmem>>, %arg6: memref<32x128xf32, #tpu.memory_space<vmem>>, %arg7: memref<32x128xf32, #tpu.memory_space<vmem>>) attributes {dimension_semantics = [#tpu.dimension_semantics<parallel>, #tpu.dimension_semantics<arbitrary>], iteration_bounds = array<i64: 1, 1>, scalar_prefetch = 0 : i64, scratch_operands = 2 : i64, tpu.core_type = #tpu.core_type<tc>, window_params = [{transform_indices = @transform_0, window_bounds = array<i64: 32, 128>}, {transform_indices = @transform_1, window_bounds = array<i64: 32, 128>}, {transform_indices = @transform_2, window_bounds = array<i64: 1, 1, 128>}, {transform_indices = @transform_3, window_bounds = array<i64: 1, 1, 128>}]} {
    %c0_i32 = arith.constant 0 : i32
    %0 = arith.cmpi eq, %arg1, %c0_i32 : i32
    %1 = arith.extui %0 : i1 to i32
    %c0_i32_0 = arith.constant 0 : i32
    %2 = arith.cmpi ne, %1, %c0_i32_0 : i32
    scf.if %2 {
      %cst = arith.constant 0.000000e+00 : f32
      %17 = vector.broadcast %cst : f32 to vector<32x128xf32>
      %c0_14 = arith.constant 0 : index
      %c0_15 = arith.constant 0 : index
      %18 = vector.load %arg6[%c0_14, %c0_15] : memref<32x128xf32, #tpu.memory_space<vmem>>, vector<32x128xf32>
      tpu.vector_store %arg6[%c0_14, %c0_15], %17 {strides = array<i32>} : memref<32x128xf32, #tpu.memory_space<vmem>>, vector<32x128xf32>,
      %cst_16 = arith.constant 0.000000e+00 : f32
      %19 = vector.broadcast %cst_16 : f32 to vector<32x128xf32>
      %c0_17 = arith.constant 0 : index
      %c0_18 = arith.constant 0 : index
      %20 = vector.load %arg7[%c0_17, %c0_18] : memref<32x128xf32, #tpu.memory_space<vmem>>, vector<32x128xf32>
      tpu.vector_store %arg7[%c0_17, %c0_18], %19 {strides = array<i32>} : memref<32x128xf32, #tpu.memory_space<vmem>>, vector<32x128xf32>,
    } else {
    }
    %c0 = arith.constant 0 : index
    %c0_1 = arith.constant 0 : index
    %3 = vector.load %arg2[%c0, %c0_1] : memref<32x128xf32, #tpu.memory_space<vmem>>, vector<32x128xf32>
    %c0_2 = arith.constant 0 : index
    %c0_3 = arith.constant 0 : index
    %4 = vector.load %arg3[%c0_2, %c0_3] : memref<32x128xi8, #tpu.memory_space<vmem>>, vector<32x128xi8>
    %5 = arith.sitofp %4 : vector<32x128xi8> to vector<32x128xf32>
    %c0_4 = arith.constant 0 : index
    %c0_5 = arith.constant 0 : index
    %6 = vector.load %arg6[%c0_4, %c0_5] : memref<32x128xf32, #tpu.memory_space<vmem>>, vector<32x128xf32>
    %7 = arith.mulf %3, %5 : vector<32x128xf32>
    %8 = arith.addf %6, %7 : vector<32x128xf32>
    %c0_6 = arith.constant 0 : index
    %c0_7 = arith.constant 0 : index
    %9 = vector.load %arg6[%c0_6, %c0_7] : memref<32x128xf32, #tpu.memory_space<vmem>>, vector<32x128xf32>
    tpu.vector_store %arg6[%c0_6, %c0_7], %8 {strides = array<i32>} : memref<32x128xf32, #tpu.memory_space<vmem>>, vector<32x128xf32>,
    %c0_8 = arith.constant 0 : index
    %c0_9 = arith.constant 0 : index
    %10 = vector.load %arg7[%c0_8, %c0_9] : memref<32x128xf32, #tpu.memory_space<vmem>>, vector<32x128xf32>
    %11 = arith.addf %3, %5 : vector<32x128xf32>
    %12 = arith.addf %10, %11 : vector<32x128xf32>
    %c0_10 = arith.constant 0 : index
    %c0_11 = arith.constant 0 : index
    %13 = vector.load %arg7[%c0_10, %c0_11] : memref<32x128xf32, #tpu.memory_space<vmem>>, vector<32x128xf32>
    tpu.vector_store %arg7[%c0_10, %c0_11], %12 {strides = array<i32>} : memref<32x128xf32, #tpu.memory_space<vmem>>, vector<32x128xf32>,
    %c0_i32_12 = arith.constant 0 : i32
    %14 = arith.cmpi eq, %arg1, %c0_i32_12 : i32
    %15 = arith.extui %14 : i1 to i32
    %c0_i32_13 = arith.constant 0 : i32
    %16 = arith.cmpi ne, %15, %c0_i32_13 : i32
    scf.if %16 {
      %c0_14 = arith.constant 0 : index
      %c0_15 = arith.constant 0 : index
      %17 = vector.load %arg6[%c0_14, %c0_15] : memref<32x128xf32, #tpu.memory_space<vmem>>, vector<32x128xf32>
      %cst = arith.constant dense<0.000000e+00> : vector<128xf32>
      %18 = vector.multi_reduction <add>, %17, %cst [0] : vector<32x128xf32> to vector<128xf32>
      %19 = vector.shape_cast %18 : vector<128xf32> to vector<1x128xf32>
      %20 = vector.shape_cast %19 : vector<1x128xf32> to vector<1x1x128xf32>
      %c0_16 = arith.constant 0 : index
      %c0_17 = arith.constant 0 : index
      %c0_18 = arith.constant 0 : index
      %21 = vector.load %arg4[%c0_16, %c0_17, %c0_18] : memref<1x1x128xf32, #tpu.memory_space<vmem>>, vector<1x1x128xf32>
      tpu.vector_store %arg4[%c0_16, %c0_17, %c0_18], %20 {strides = array<i32>} : memref<1x1x128xf32, #tpu.memory_space<vmem>>, vector<1x1x128xf32>,
      %c0_19 = arith.constant 0 : index
      %c0_20 = arith.constant 0 : index
      %22 = vector.load %arg7[%c0_19, %c0_20] : memref<32x128xf32, #tpu.memory_space<vmem>>, vector<32x128xf32>
      %cst_21 = arith.constant dense<0.000000e+00> : vector<128xf32>
      %23 = vector.multi_reduction <add>, %22, %cst_21 [0] : vector<32x128xf32> to vector<128xf32>
      %24 = vector.shape_cast %23 : vector<128xf32> to vector<1x128xf32>
      %25 = vector.shape_cast %24 : vector<1x128xf32> to vector<1x1x128xf32>
      %c0_22 = arith.constant 0 : index
      %c0_23 = arith.constant 0 : index
      %c0_24 = arith.constant 0 : index
      %26 = vector.load %arg5[%c0_22, %c0_23, %c0_24] : memref<1x1x128xf32, #tpu.memory_space<vmem>>, vector<1x1x128xf32>
      tpu.vector_store %arg5[%c0_22, %c0_23, %c0_24], %25 {strides = array<i32>} : memref<1x1x128xf32, #tpu.memory_space<vmem>>, vector<1x1x128xf32>,
    } else {
    }
    return
  }
  func.func @transform_0(%arg0: i32, %arg1: i32) -> (i32, i32) {
    %c1_i32 = arith.constant 1 : i32
    %0 = arith.muli %arg0, %c1_i32 : i32
    %1 = arith.addi %0, %arg1 : i32
    %c0_i32 = arith.constant 0 : i32
    %2 = arith.minsi %1, %c0_i32 : i32
    %c0_i32_0 = arith.constant 0 : i32
    %c0_i32_1 = arith.constant 0 : i32
    return %2, %c0_i32_0 : i32, i32
  }
  func.func @transform_1(%arg0: i32, %arg1: i32) -> (i32, i32) {
    %c1_i32 = arith.constant 1 : i32
    %0 = arith.muli %arg0, %c1_i32 : i32
    %1 = arith.addi %0, %arg1 : i32
    %c0_i32 = arith.constant 0 : i32
    %2 = arith.minsi %1, %c0_i32 : i32
    %c0_i32_0 = arith.constant 0 : i32
    %c0_i32_1 = arith.constant 0 : i32
    return %2, %c0_i32_0 : i32, i32
  }
  func.func @transform_2(%arg0: i32, %arg1: i32) -> (i32, i32, i32) {
    %c0_i32 = arith.constant 0 : i32
    %c0_i32_0 = arith.constant 0 : i32
    %c0_i32_1 = arith.constant 0 : i32
    return %arg0, %c0_i32, %c0_i32_0 : i32, i32, i32
  }
  func.func @transform_3(%arg0: i32, %arg1: i32) -> (i32, i32, i32) {
    %c0_i32 = arith.constant 0 : i32
    %c0_i32_0 = arith.constant 0 : i32
    %c0_i32_1 = arith.constant 0 : i32
    return %arg0, %c0_i32, %c0_i32_0 : i32, i32, i32
  }
}

</mosaic_0001>

<llo_original>
// kernel: tpu_custom_call.1
$region0: #{tpu_custom_call.1}
  #allocation0 [shape = 'u32[]', space=smem, size = 0x4, offset = 0x4, fixed_abs, tag = 'smem constant byte address 0x4 - core index']
  #allocation1 [shape = 'u32[72,128]{1,0:T(1,128)}', space=vmem, size = 0x9000, scoped, tag = 'internal scratch']
  #allocation2 [shape = 'f32[32,128]{1,0:T(8,128)}', space=vmem, size = 0x4000, scoped, tag = 'scratch operand']
  #allocation3 [shape = 'f32[32,128]{1,0:T(8,128)}', space=vmem, size = 0x4000, scoped, tag = 'scratch operand']
  %s0 = inlined_call_operand.hbm [shape: f32[32,128], index: 0, kind: input, shape index: {}]
  %s1 = inlined_call_operand.hbm [shape: s8[32,128], index: 1, kind: input, shape index: {}]
  %s2 = inlined_call_operand.hbm [shape: f32[1,1,128], index: 2, kind: output, shape index: {0}]
  %s3 = inlined_call_operand.hbm [shape: f32[1,1,128], index: 3, kind: output, shape index: {1}]
  %4 = xla_tuple %s2, %s3
  %s5 = sld [smem:[#allocation0]]
  $region42: #{tpu_custom_call.1} parent=0
    _
  %s7 = ssub.s32 1, %s5
  %s8 = scalar_select 0, %s7, %s5
  $region1: #{tpu_custom_call.1} parent=0
    #allocation4 [shape = 'u8[16384]{0}', space=vmem, size = 0x4000, scoped, tag = 'input window, operand 0, single buffered']
    #allocation5 [shape = 's32[1]{0}', space=sflag, size = 0x4, scoped, tag = 'scoped memory for tpu_custom_call.1']
    #allocation6 [shape = 's32[1]{0}', space=sflag, size = 0x4, scoped, tag = 'scoped memory for tpu_custom_call.1']
    #allocation7 [shape = 'u8[4096]{0}', space=vmem, size = 0x1000, scoped, tag = 'input window, operand 1, single buffered']
    #allocation8 [shape = 's32[1]{0}', space=sflag, size = 0x4, scoped, tag = 'scoped memory for tpu_custom_call.1']
    #allocation9 [shape = 'u8[512]{0}', space=vmem, size = 0x400, scoped, tag = 'output window, operand 0, single buffered']
    #allocation10 [shape = 'u8[512]{0}', space=vmem, size = 0x400, scoped, tag = 'output window, operand 1, single buffered']
    #allocation11 [shape = 's32[1]{0}', space=sflag, size = 0x4, scoped, tag = 'scoped memory for tpu_custom_call.1']
    %9 = vsyncpa [#allocation5], 0
    %10 = vsyncpa [#allocation8], 0
    %11 = vsyncpa [#allocation6], 0
    %12 = vsyncpa [#allocation11], 0
    // Predicated region
    $region2: #{tpu_custom_call.1} parent=1 // pred_check
      _
    $region3: #{tpu_custom_call.1} parent=1 // pred_check_branch
      %14 = sbr.rel (0) target = $region5
    $region4: #{tpu_custom_call.1} parent=1 // pred_region
      %s15 = sadd.s32 0, 0
      %p16 = scmp.lt.s32.totalorder %s15, 0
      %s17 = scalar_select %p16, %s15, 0
      %s18 = smul.u32 4, %s17
      %20 = vsyncadd [#allocation5], 0
      %s21 = smul.addr %s18, 8
      %s22 = scalar_lea.hbm %s0, %s21
      %s23 = sshll.u32 %s22, 4
      %s24 = int_to_ptr.hbm [resolvable:$true] %s23
      %s25 = sshll.u32 [#allocation4], 4
      %s26 = int_to_ptr.vmem [resolvable:$true] %s25
      %31 = dma.hbm_to_vmem [thread:$0]  %s24, 512, %s26, [#allocation5], 128, 128, 8
    $region5: #{tpu_custom_call.1} parent=1 // pred_fallthru
      _
    // Predicated region
    $region6: #{tpu_custom_call.1} parent=1 // pred_check
      _
    $region7: #{tpu_custom_call.1} parent=1 // pred_check_branch
      %33 = sbr.rel (0) target = $region9
    $region8: #{tpu_custom_call.1} parent=1 // pred_region
      %s34 = sadd.s32 0, 0
      %p35 = scmp.lt.s32.totalorder %s34, 0
      %s36 = scalar_select %p35, %s34, 0
      %38 = vsyncadd [#allocation8], 0
      %s39 = smul.addr %s36, 8
      %s40 = scalar_lea.hbm %s1, %s39
      %s42 = sshll.u32 %s40, 4
      %s43 = int_to_ptr.hbm [resolvable:$true] %s42
      %s44 = sshll.u32 [#allocation7], 4
      %s45 = int_to_ptr.vmem [resolvable:$true] %s44
      %47 = dma.hbm_to_vmem [thread:$0]  %s43, 128, %s45, [#allocation8]
    $region9: #{tpu_custom_call.1} parent=1 // pred_fallthru
      _
    // Predicated region
    $region10: #{tpu_custom_call.1} parent=1 // pred_check
      _
    $region11: #{tpu_custom_call.1} parent=1 // pred_check_branch
      %49 = sbr.rel (0) target = $region13
    $region12: #{tpu_custom_call.1} parent=1 // pred_region
      %51 = dma.done [#allocation5], 512
    $region13: #{tpu_custom_call.1} parent=1 // pred_fallthru
      _
    // Predicated region
    $region14: #{tpu_custom_call.1} parent=1 // pred_check
      _
    $region15: #{tpu_custom_call.1} parent=1 // pred_check_branch
      %53 = sbr.rel (0) target = $region17
    $region16: #{tpu_custom_call.1} parent=1 // pred_region
      %55 = dma.done [#allocation8], 128
    $region17: #{tpu_custom_call.1} parent=1 // pred_fallthru
      _
    %s56 = sadd.s32 0, 0
    %p57 = scmp.lt.s32.totalorder %s56, 0
    %s58 = scalar_select %p57, %s56, 0
    %s59 = smul.u32 4, %s58
    %s60 = sadd.s32 0, 0
    %p61 = scmp.lt.s32.totalorder %s60, 0
    %s62 = scalar_select %p61, %s60, 0
    %p63 = scmp.eq.s32.totalorder 0, 0
    // Predicated region
    $region18: #{tpu_custom_call.1} parent=1 // pred_check
      %p64 = pneg %p63
    $region19: #{tpu_custom_call.1} parent=1 // pred_check_branch
      %66 = sbr.rel (%p64) target = $region21
    $region20: #{tpu_custom_call.1} parent=1 // pred_region
      %67 = vst [vmem:[#allocation2] sm:$0xff] 0.0
      %68 = vst [vmem:[#allocation2 + $0x8] sm:$0xff] 0.0
      %69 = vst [vmem:[#allocation2 + $0x10] sm:$0xff] 0.0
      %70 = vst [vmem:[#allocation2 + $0x18] sm:$0xff] 0.0
      %71 = vst [vmem:[#allocation3] sm:$0xff] 0.0
      %72 = vst [vmem:[#allocation3 + $0x8] sm:$0xff] 0.0
      %73 = vst [vmem:[#allocation3 + $0x10] sm:$0xff] 0.0
      %74 = vst [vmem:[#allocation3 + $0x18] sm:$0xff] 0.0
    $region21: #{tpu_custom_call.1} parent=1 // pred_fallthru
      _
    %v75 = vld [vmem:[#allocation4] sm:$0xff]
    %v76 = vld [vmem:[#allocation4 + $0x8] sm:$0xff]
    %v77 = vld [vmem:[#allocation4 + $0x10] sm:$0xff]
    %v78 = vld [vmem:[#allocation4 + $0x18] sm:$0xff]
    %v79 = vld [vmem:[#allocation7] sm:$0xff]
    %v80 = vunpack.c.0.s8 %v79
    %v81 = vunpack.c.1.s8 %v79
    %v82 = vunpack.c.2.s8 %v79
    %v83 = vunpack.c.3.s8 %v79
    %v84 = vcvt.s32.f32 %v80
    %v85 = vcvt.s32.f32 %v81
    %v86 = vcvt.s32.f32 %v82
    %v87 = vcvt.s32.f32 %v83
    %v88 = vld [vmem:[#allocation2] sm:$0xff]
    %v89 = vld [vmem:[#allocation2 + $0x8] sm:$0xff]
    %v90 = vld [vmem:[#allocation2 + $0x10] sm:$0xff]
    %v91 = vld [vmem:[#allocation2 + $0x18] sm:$0xff]
    %v92 = vmul.f32 %v75, %v84
    %v93 = vmul.f32 %v76, %v85
    %v94 = vmul.f32 %v77, %v86
    %v95 = vmul.f32 %v78, %v87
    %v96 = vadd.f32 %v88, %v92
    %v97 = vadd.f32 %v89, %v93
    %v98 = vadd.f32 %v90, %v94
    %v99 = vadd.f32 %v91, %v95
    %100 = vst [vmem:[#allocation2] sm:$0xff] %v96
    %101 = vst [vmem:[#allocation2 + $0x8] sm:$0xff] %v97
    %102 = vst [vmem:[#allocation2 + $0x10] sm:$0xff] %v98
    %103 = vst [vmem:[#allocation2 + $0x18] sm:$0xff] %v99
    %v104 = vld [vmem:[#allocation3] sm:$0xff]
    %v105 = vld [vmem:[#allocation3 + $0x8] sm:$0xff]
    %v106 = vld [vmem:[#allocation3 + $0x10] sm:$0xff]
    %v107 = vld [vmem:[#allocation3 + $0x18] sm:$0xff]
    %v108 = vadd.f32 %v75, %v84
    %v109 = vadd.f32 %v76, %v85
    %v110 = vadd.f32 %v77, %v86
    %v111 = vadd.f32 %v78, %v87
    %v112 = vadd.f32 %v104, %v108
    %v113 = vadd.f32 %v105, %v109
    %v114 = vadd.f32 %v106, %v110
    %v115 = vadd.f32 %v107, %v111
    %116 = vst [vmem:[#allocation3] sm:$0xff] %v112
    %117 = vst [vmem:[#allocation3 + $0x8] sm:$0xff] %v113
    %118 = vst [vmem:[#allocation3 + $0x10] sm:$0xff] %v114
    %119 = vst [vmem:[#allocation3 + $0x18] sm:$0xff] %v115
    // Predicated region
    $region22: #{tpu_custom_call.1} parent=1 // pred_check
      %p120 = pneg %p63
    $region23: #{tpu_custom_call.1} parent=1 // pred_check_branch
      %122 = sbr.rel (%p120) target = $region25
    $region24: #{tpu_custom_call.1} parent=1 // pred_region
      %v123 = vld [vmem:[#allocation2] sm:$0xff]
      %v124 = vld [vmem:[#allocation2 + $0x8] sm:$0xff]
      %v125 = vld [vmem:[#allocation2 + $0x10] sm:$0xff]
      %v126 = vld [vmem:[#allocation2 + $0x18] sm:$0xff]
      %v127 = vadd.f32 %v123, %v124
      %v128 = vadd.f32 %v127, %v125
      %v129 = vadd.f32 %v128, %v126
      %v130 = vrot.slane %v129, 4
      %v131 = vadd.f32 %v129, %v130
      %v132 = vrot.slane %v131, 2
      %v133 = vadd.f32 %v131, %v132
      %v134 = vrot.slane %v133, 1
      %v135 = vadd.f32 %v133, %v134
      %136 = vst [vmem:[#allocation9] sm:$0x1] %v135
      %v137 = vld [vmem:[#allocation3] sm:$0xff]
      %v138 = vld [vmem:[#allocation3 + $0x8] sm:$0xff]
      %v139 = vld [vmem:[#allocation3 + $0x10] sm:$0xff]
      %v140 = vld [vmem:[#allocation3 + $0x18] sm:$0xff]
      %v141 = vadd.f32 %v137, %v138
      %v142 = vadd.f32 %v141, %v139
      %v143 = vadd.f32 %v142, %v140
      %v144 = vrot.slane %v143, 4
      %v145 = vadd.f32 %v143, %v144
      %v146 = vrot.slane %v145, 2
      %v147 = vadd.f32 %v145, %v146
      %v148 = vrot.slane %v147, 1
      %v149 = vadd.f32 %v147, %v148
      %150 = vst [vmem:[#allocation10] sm:$0x1] %v149
    $region25: #{tpu_custom_call.1} parent=1 // pred_fallthru
      _
    // Predicated region
    $region26: #{tpu_custom_call.1} parent=1 // pred_check
      _
    $region27: #{tpu_custom_call.1} parent=1 // pred_check_branch
      %152 = sbr.rel (0) target = $region29
    $region28: #{tpu_custom_call.1} parent=1 // pred_region
      %154 = vsyncadd [#allocation6], 0
      %s156 = sshll.u32 [#allocation9], 4
      %s157 = int_to_ptr.vmem [resolvable:$true] %s156
      %s158 = sshll.u32 %s2, 4
      %s159 = int_to_ptr.hbm [resolvable:$true] %s158
      %161 = dma.vmem_to_hbm [thread:$0]  %s157, 16, %s159, [#allocation6]
    $region29: #{tpu_custom_call.1} parent=1 // pred_fallthru
      _
    // Predicated region
    $region30: #{tpu_custom_call.1} parent=1 // pred_check
      _
    $region31: #{tpu_custom_call.1} parent=1 // pred_check_branch
      %163 = sbr.rel (0) target = $region33
    $region32: #{tpu_custom_call.1} parent=1 // pred_region
      %165 = vsyncadd [#allocation11], 0
      %s167 = sshll.u32 [#allocation10], 4
      %s168 = int_to_ptr.vmem [resolvable:$true] %s167
      %s169 = sshll.u32 %s3, 4
      %s170 = int_to_ptr.hbm [resolvable:$true] %s169
      %172 = dma.vmem_to_hbm [thread:$0]  %s168, 16, %s170, [#allocation11]
    $region33: #{tpu_custom_call.1} parent=1 // pred_fallthru
      _
    // Predicated region
    $region34: #{tpu_custom_call.1} parent=1 // pred_check
      _
    $region35: #{tpu_custom_call.1} parent=1 // pred_check_branch
      %174 = sbr.rel (0) target = $region37
    $region36: #{tpu_custom_call.1} parent=1 // pred_region
      %176 = dma.done [#allocation6], 16
    $region37: #{tpu_custom_call.1} parent=1 // pred_fallthru
      _
    // Predicated region
    $region38: #{tpu_custom_call.1} parent=1 // pred_check
      _
    $region39: #{tpu_custom_call.1} parent=1 // pred_check_branch
      %178 = sbr.rel (0) target = $region41
    $region40: #{tpu_custom_call.1} parent=1 // pred_region
      %180 = dma.done [#allocation11], 16
    $region41: #{tpu_custom_call.1} parent=1 // pred_fallthru
      _
    %181 = vsyncpa [#allocation5], 1
    %182 = vsyncpa [#allocation8], 1
    %183 = vsyncpa [#allocation6], 1
    %184 = vsyncpa [#allocation11], 1

</llo_original>
